<compile_context>
chip_gen: v6e
topology: v6e:2x2x1
jax: 0.10.0
libtpu: 0.0.40
codegen_flags: <defaults>
</compile_context>

<pallas_src>
import math
from typing import List, Optional, Tuple

import jax
import jax.numpy as jnp
from jax.experimental import pallas as pl
from jax.experimental.pallas import tpu as pltpu

_LEAKY_SLOPE = 0.01          # torch.nn.LeakyReLU default negative_slope
_LANE = 128
_SUBLANE = 8
_FMA_K_MAX = 8               # layer-1 state K at or below this uses VPU FMA, not MXU
_SINGLE_BUFFER_WEIGHT_BYTES = 2 << 20   # single-buffer resident weights past this


def _round_up(x: int, m: int) -> int:
    return ((x + m - 1) // m) * m


def _choose_tm(m_rows: int) -> int:
    """Row-tile size: >=2 grid steps whenever the batch is non-trivial (v7x has
    2 TensorCores), capped at 256 rows (v5e 16 MiB scoped-VMEM default and single
    vector-store slot).  Sweep via the `tm=` kwarg per generation if needed."""
    m8 = _round_up(max(m_rows, _SUBLANE), _SUBLANE)
    if m8 <= 2 * _SUBLANE:                       # tiny batch: one step is fine
        return m8
    return min(256, _round_up(pl.cdiv(m8, 2), _SUBLANE))


# ----------------------------------------------------------------------------
# Input normalization (stand-ins for safe_mf.utils.normalize_states/_mus)
# ----------------------------------------------------------------------------
# TODO(synk): the exact normalize_states / normalize_mus from safe_mf.utils are
# not part of the provided module; a [-1, 1] rescale (+ optional polar embedding)
# and a cell-count scaling are used.  The same definitions are reproduced inside
# the Pallas kernel, so kernel and reference agree.
def normalize_states(states, state_space, polar: bool = False):
    low, high = state_space
    x = 2.0 * (states - low) / (high - low) - 1.0
    if polar:
        x = jnp.concatenate([jnp.cos(math.pi * x), jnp.sin(math.pi * x)], axis=-1)
    return x


def normalize_mus(mu, gmm: bool = False):
    return mu if gmm else mu * mu.shape[-1]


# ----------------------------------------------------------------------------
# Fused Pallas kernel: normalize + (split) Linear -> LeakyReLU ... -> Tanh
# ----------------------------------------------------------------------------
def _make_mlp_kernel(num_linear: int, state_space, polar: bool,
                     mu_scale: float, s_dim: int):
    low, high = float(state_space[0]), float(state_space[1])
    s_scale = 2.0 / (high - low)
    s_shift = -low * s_scale - 1.0

    def kernel(s_ref, mu_ref, *refs):
        o_ref = refs[-1]
        wb = refs[:-1]                     # w1s, w1m, b1, (w2, b2), ...
        w1s, w1m, b1 = wb[0], wb[1], wb[2]

        # ---- fused input build: normalize; concat replaced by split layer-1
        ns = s_ref[...] * s_scale + s_shift                        # f32 (tm, s_dim)
        if polar:
            ns = jnp.concatenate(
                [jnp.cos(math.pi * ns), jnp.sin(math.pi * ns)], axis=-1)
        nm = mu_ref[...] * mu_scale                 # (tm, mdim) paired / (1, mdim) bcast

        # layer-1 mu half: for the broadcast case this is a (1, K) dot folded
        # into the bias; for the paired case a per-row K<=mu_dim matmul.
        base = jnp.dot(nm, w1m[...], preferred_element_type=jnp.float32) + b1[...]

        # layer-1 state half: tiny K (2-8) -> unrolled VPU broadcast-FMA, no MXU push
        if s_dim <= _FMA_K_MAX:
            w1s_v = w1s[...]
            h = base
            for k in range(s_dim):
                h = h + ns[:, k:k + 1] * w1s_v[k:k + 1, :]         # (tm,1)*(1,H)
        else:
            h = base + jnp.dot(ns, w1s[...], preferred_element_type=jnp.float32)

        # hidden layers: LeakyReLU (max form) + bf16 matmul with f32 accumulation
        idx = 3
        for _ in range(1, num_linear):
            h = jnp.maximum(h, _LEAKY_SLOPE * h)                   # f32 VPU
            w, b = wb[idx], wb[idx + 1]
            idx += 2
            h = jnp.dot(h.astype(w.dtype), w[...],
                        preferred_element_type=jnp.float32) + b[...]

        # final_dim columns only (~8 B/row): writeback is no longer the bottleneck
        o_ref[...] = jnp.tanh(h).astype(o_ref.dtype)

    return kernel


# ----------------------------------------------------------------------------
# MFPolicy: parameter construction + forward (mirrors the PyTorch module)
# ----------------------------------------------------------------------------
class MFPolicy:
    def __init__(self, state_dim: int, mu_dim: int, action_dim: int,
                 hallucinated_control: bool, hidden_dims: List[int],
                 state_space: Tuple[float, float],
                 action_space: Tuple[float, float],
                 gmm: bool, polar: bool, *, key) -> None:
        assert len(hidden_dims) > 0
        self.mu_dim = mu_dim
        self.state_dim = state_dim
        self.action_dim = action_dim
        self.hallucinated_control = hallucinated_control
        self.state_space = state_space
        self.action_space = action_space        # stored, unused in forward (as in PyTorch)
        self.gmm = gmm
        self.polar = polar

        final_dim = state_dim + action_dim if hallucinated_control else action_dim
        s_dim = 2 * state_dim if polar else state_dim
        m_dim = 2 if gmm else mu_dim

        # ---- raw (PyTorch-equivalent) parameters: W stored [in, out], bias zeros
        layer_dims = [s_dim + m_dim] + list(hidden_dims) + [final_dim]
        gain = math.sqrt(2.0)                   # xavier_uniform_ with gain=sqrt(2)
        params = []
        for li in range(len(layer_dims) - 1):
            fan_in, fan_out = layer_dims[li], layer_dims[li + 1]
            key, sub = jax.random.split(key)
            limit = gain * math.sqrt(6.0 / (fan_in + fan_out))
            w = jax.random.uniform(sub, (fan_in, fan_out), jnp.float32,
                                   minval=-limit, maxval=limit)
            b = jnp.zeros((1, fan_out), jnp.float32)
            params.append((w, b))
        self.params = params                    # unpadded f32 (reference / export)

        # ---- kernel-ready params: layer-1 split into state/mu halves, hidden N
        #      dims lane-padded to 128, FINAL layer left at final_dim (tiny store),
        #      layer>=2 weights cast to bf16.
        h_padded = [_round_up(d, _LANE) for d in hidden_dims]
        w1, b1 = params[0]
        h0p = h_padded[0]
        kp = [
            jnp.pad(w1[:s_dim], ((0, 0), (0, h0p - w1.shape[1]))),            # f32
            jnp.pad(w1[s_dim:], ((0, 0), (0, h0p - w1.shape[1]))),            # f32
            jnp.pad(b1, ((0, 0), (0, h0p - b1.shape[1]))),                    # f32
        ]
        prev = h0p
        out_cols = h_padded[1:] + [final_dim]
        for li in range(1, len(params)):
            w, b = params[li]
            ncol = out_cols[li - 1]
            kp.append(jnp.pad(w, ((0, prev - w.shape[0]),
                                  (0, ncol - w.shape[1]))).astype(jnp.bfloat16))
            kp.append(jnp.pad(b, ((0, 0), (0, ncol - b.shape[1]))))
            prev = ncol
        self._kparams = kp
        self._s_dim = s_dim
        self._m_dim = m_dim
        self._final_dim = final_dim
        self._h_padded = h_padded
        self._mu_scale = 1.0 if gmm else float(m_dim)
        self._weight_bytes = sum(int(a.size) * a.dtype.itemsize for a in kp)
        self._single_buffer_weights = self._weight_bytes > _SINGLE_BUFFER_WEIGHT_BYTES
        self._kernel = _make_mlp_kernel(len(params), state_space, polar,
                                        self._mu_scale, s_dim)

    # ---------------------------------------------------------------- helpers
    def _weight_specs(self, index_map):
        if self._single_buffer_weights:
            # Constant-index resident weights: no re-DMA across grid steps, so a
            # single buffer halves weight VMEM (matters on v7x's 64 MiB VMEM).
            return [pl.BlockSpec(a.shape, index_map, pipeline_mode=pl.Buffered(1))
                    for a in self._kparams]
        return [pl.BlockSpec(a.shape, index_map) for a in self._kparams]

    def _compiler_params(self, tm, semantics):
        wbuf = 1 if self._single_buffer_weights else 2
        widest = max(self._h_padded)
        est = (self._weight_bytes * wbuf
               + 2 * tm * (self._s_dim + self._m_dim + self._final_dim) * 4
               + 6 * tm * widest * 4          # activation temporaries headroom
               + (2 << 20))
        vmem = None if est <= (12 << 20) else min(64 << 20, est)
        # TODO(synk): gate tm / vmem_limit on pltpu.get_tpu_info() per generation.
        return pltpu.CompilerParams(dimension_semantics=semantics,
                                    vmem_limit_bytes=vmem)

    # ------------------------------------------------------------------ call
    def __call__(self, states: jnp.ndarray, mu: jnp.ndarray,
                 explore: Optional[float] = None, *,
                 tm: Optional[int] = None) -> jnp.ndarray:
        # `explore` accepted for interface parity; the reference forward ignores it.
        states = states.astype(jnp.float32)
        mu = mu.astype(jnp.float32)
        if states.shape[0] == mu.shape[0]:
            return self._forward_paired(states, mu, tm)
        return self._forward_broadcast(states, mu, tm)

    # case A: one mu row per state row -----------------------------------
    def _forward_paired(self, states, mu, tm):
        m = states.shape[0]
        tm = tm or _choose_tm(m)
        m_pad = _round_up(m, tm)
        if m_pad != m:
            states = jnp.pad(states, ((0, m_pad - m), (0, 0)))
            mu = jnp.pad(mu, ((0, m_pad - m), (0, 0)))
        sdim, mdim = states.shape[1], mu.shape[1]
        out = pl.pallas_call(
            self._kernel,
            out_shape=jax.ShapeDtypeStruct((m_pad, self._final_dim), jnp.float32),
            grid_spec=pltpu.PrefetchScalarGridSpec(
                num_scalar_prefetch=0,
                grid=(m_pad // tm,),
                in_specs=[pl.BlockSpec((tm, sdim), lambda i: (i, 0)),
                          pl.BlockSpec((tm, mdim), lambda i: (i, 0))]
                         + self._weight_specs(lambda i: (0, 0)),
                out_specs=pl.BlockSpec((tm, self._final_dim), lambda i: (i, 0)),
            ),
            compiler_params=self._compiler_params(tm, ("parallel",)),
        )(states, mu, *self._kparams)
        return out if m_pad == m else out[:m]

    # cases B/C: mu rows broadcast over all state rows --------------------
    def _forward_broadcast(self, states, mu, tm):
        m, n = states.shape[0], mu.shape[0]
        tm = tm or _choose_tm(m)
        m_pad = _round_up(m, tm)
        if m_pad != m:
            states = jnp.pad(states, ((0, m_pad - m), (0, 0)))
        sdim, mdim = states.shape[1], mu.shape[1]
        mu3 = mu.reshape(n, 1, mdim)
        num_j = m_pad // tm
        out = pl.pallas_call(
            self._kernel,
            out_shape=jax.ShapeDtypeStruct((n * m_pad, self._final_dim), jnp.float32),
            grid_spec=pltpu.PrefetchScalarGridSpec(
                num_scalar_prefetch=0,
                grid=(n, num_j),
                in_specs=[pl.BlockSpec((tm, sdim), lambda i, j: (j, 0)),
                          pl.BlockSpec((None, 1, mdim), lambda i, j: (i, 0, 0))]
                         + self._weight_specs(lambda i, j: (0, 0)),
                out_specs=pl.BlockSpec((tm, self._final_dim),
                                       lambda i, j: (i * num_j + j, 0)),
            ),
            compiler_params=self._compiler_params(tm, ("parallel", "parallel")),
        )(states, mu3, *self._kparams)
        if m_pad != m:
            out = out.reshape(n, m_pad, self._final_dim)[:, :m, :]
            out = out.reshape(n * m, self._final_dim)
        return out


# ----------------------------------------------------------------------------
# Pure-JAX reference (mirrors the PyTorch forward; bf16 hidden layers like kernel)
# ----------------------------------------------------------------------------
def _ref_forward(policy: MFPolicy, states, mu):
    ns = normalize_states(states, policy.state_space, polar=policy.polar)
    nm = normalize_mus(mu, gmm=policy.gmm)
    if states.shape[0] == mu.shape[0]:
        inputs = jnp.concatenate((ns, nm), axis=1)
    elif mu.shape[0] == 1:
        inputs = jnp.concatenate(
            (ns, jnp.broadcast_to(nm, (states.shape[0], nm.shape[1]))), axis=1)
    else:
        n, m = mu.shape[0], states.shape[0]
        ns_r = jnp.broadcast_to(ns[None, :, :], (n, m, ns.shape[1]))
        nm_r = jnp.broadcast_to(nm[:, None, :], (n, m, nm.shape[1]))
        inputs = jnp.concatenate((ns_r, nm_r), axis=2)
        inputs = inputs.reshape(-1, inputs.shape[2])
    h = inputs
    num_linear = len(policy.params)
    for li, (w, b) in enumerate(policy.params):
        if li == 0:
            z = jnp.dot(h, w, precision=jax.lax.Precision.HIGHEST) + b
        else:
            z = jnp.dot(h.astype(jnp.bfloat16), w.astype(jnp.bfloat16),
                        preferred_element_type=jnp.float32) + b
        h = jnp.tanh(z) if li == num_linear - 1 else jnp.where(z > 0, z, _LEAKY_SLOPE * z)
    return h


if __name__ == "__main__":
    key = jax.random.PRNGKey(0)
    k_policy, k_states, k_mu, k_mu_p, k_mu_c = jax.random.split(key, 5)

    state_dim, mu_dim, action_dim = 2, 16, 2
    hidden_dims = [32, 32]
    state_space = (0.0, 1.0)
    action_space = (-1.0, 1.0)

    policy = MFPolicy(state_dim, mu_dim, action_dim, hallucinated_control=False,
                      hidden_dims=hidden_dims, state_space=state_space,
                      action_space=action_space, gmm=False, polar=False,
                      key=k_policy)

    m = 128
    states = jax.random.uniform(k_states, (m, state_dim), jnp.float32,
                                minval=0.0, maxval=1.0)

    # case B: single mean-field row broadcast over all agents (grid (1, 2))
    mu = jax.random.uniform(k_mu, (1, mu_dim), jnp.float32)
    mu = mu / jnp.sum(mu)
    out_b = jax.block_until_ready(policy(states, mu))
    ref_b = _ref_forward(policy, states, mu)
    assert out_b.shape == (m, action_dim)
    assert jnp.allclose(out_b, ref_b, atol=2e-2, rtol=2e-2)

    # case A: paired states / mu rows (grid (2,))
    mu_p = jax.random.uniform(k_mu_p, (m, mu_dim), jnp.float32)
    mu_p = mu_p / jnp.sum(mu_p, axis=1, keepdims=True)
    out_a = jax.block_until_ready(policy(states, mu_p))
    ref_a = _ref_forward(policy, states, mu_p)
    assert out_a.shape == (m, action_dim)
    assert jnp.allclose(out_a, ref_a, atol=2e-2, rtol=2e-2)

    # case C: n x m mean-field outer product (multi-tile grid: n=4, m=64, tm=32 -> (4, 2))
    n = 4
    states_c = states[:64]
    mu_c = jax.random.uniform(k_mu_c, (n, mu_dim), jnp.float32)
    mu_c = mu_c / jnp.sum(mu_c, axis=1, keepdims=True)
    out_c = jax.block_until_ready(policy(states_c, mu_c, tm=32))
    ref_c = _ref_forward(policy, states_c, mu_c)
    assert out_c.shape == (n * 64, action_dim)
    assert jnp.allclose(out_c, ref_c, atol=2e-2, rtol=2e-2)

    print("KERNEL_OK")
</pallas_src>

<mosaic_0001>
module attributes {stable_mosaic.version = 11 : i64} {
  func.func @kernel(%arg0: i32, %arg1: i32, %arg2: memref<64x2xf32, #tpu.memory_space<vmem>>, %arg3: memref<1x1x16xf32, #tpu.memory_space<vmem>>, %arg4: memref<2x128xf32, #tpu.memory_space<vmem>>, %arg5: memref<16x128xf32, #tpu.memory_space<vmem>>, %arg6: memref<1x128xf32, #tpu.memory_space<vmem>>, %arg7: memref<128x128xbf16, #tpu.memory_space<vmem>>, %arg8: memref<1x128xf32, #tpu.memory_space<vmem>>, %arg9: memref<128x2xbf16, #tpu.memory_space<vmem>>, %arg10: memref<1x2xf32, #tpu.memory_space<vmem>>, %arg11: memref<64x2xf32, #tpu.memory_space<vmem>>) attributes {dimension_semantics = [#tpu.dimension_semantics<parallel>, #tpu.dimension_semantics<parallel>], iteration_bounds = array<i64: 1, 2>, scalar_prefetch = 0 : i64, scratch_operands = 0 : i64, tpu.core_type = #tpu.core_type<tc>, window_params = [{transform_indices = @transform_0, window_bounds = array<i64: 64, 2>}, {transform_indices = @transform_1, window_bounds = array<i64: 1, 1, 16>}, {pipeline_mode = #tpu.pipeline_mode<synchronous>, transform_indices = @transform_2, window_bounds = array<i64: 2, 128>}, {pipeline_mode = #tpu.pipeline_mode<synchronous>, transform_indices = @transform_3, window_bounds = array<i64: 16, 128>}, {pipeline_mode = #tpu.pipeline_mode<synchronous>, transform_indices = @transform_4, window_bounds = array<i64: 1, 128>}, {pipeline_mode = #tpu.pipeline_mode<synchronous>, transform_indices = @transform_5, window_bounds = array<i64: 128, 128>}, {pipeline_mode = #tpu.pipeline_mode<synchronous>, transform_indices = @transform_6, window_bounds = array<i64: 1, 128>}, {pipeline_mode = #tpu.pipeline_mode<synchronous>, transform_indices = @transform_7, window_bounds = array<i64: 128, 2>}, {pipeline_mode = #tpu.pipeline_mode<synchronous>, transform_indices = @transform_8, window_bounds = array<i64: 1, 2>}, {transform_indices = @transform_9, window_bounds = array<i64: 64, 2>}]} {
    %c0 = arith.constant 0 : index
    %c0_0 = arith.constant 0 : index
    %0 = vector.load %arg2[%c0, %c0_0] : memref<64x2xf32, #tpu.memory_space<vmem>>, vector<64x2xf32>
    %cst = arith.constant 2.000000e+00 : f32
    %1 = vector.broadcast %cst : f32 to vector<64x2xf32>
    %2 = arith.mulf %0, %1 : vector<64x2xf32>
    %cst_1 = arith.constant -1.000000e+00 : f32
    %3 = vector.broadcast %cst_1 : f32 to vector<64x2xf32>
    %4 = arith.addf %2, %3 : vector<64x2xf32>
    %c0_2 = arith.constant 0 : index
    %c0_3 = arith.constant 0 : index
    %c0_4 = arith.constant 0 : index
    %5 = vector.load %arg3[%c0_2, %c0_3, %c0_4] : memref<1x1x16xf32, #tpu.memory_space<vmem>>, vector<1x1x16xf32>
    %6 = vector.shape_cast %5 : vector<1x1x16xf32> to vector<1x16xf32>
    %cst_5 = arith.constant 1.600000e+01 : f32
    %7 = vector.broadcast %cst_5 : f32 to vector<1x16xf32>
    %8 = arith.mulf %6, %7 : vector<1x16xf32>
    %c0_6 = arith.constant 0 : index
    %c0_7 = arith.constant 0 : index
    %9 = vector.load %arg5[%c0_6, %c0_7] : memref<16x128xf32, #tpu.memory_space<vmem>>, vector<16x128xf32>
    %cst_8 = arith.constant dense<0.000000e+00> : vector<1x128xf32>
    %10 = tpu.matmul %8, %9, %cst_8 {dimension_numbers = #tpu.dot_dimension_numbers<[1], [0], [0], [1], [0, 0, 1, 1], [], []>} : vector<1x16xf32>, vector<16x128xf32>, vector<1x128xf32> -> vector<1x128xf32>
    %c0_9 = arith.constant 0 : index
    %c0_10 = arith.constant 0 : index
    %11 = vector.load %arg6[%c0_9, %c0_10] : memref<1x128xf32, #tpu.memory_space<vmem>>, vector<1x128xf32>
    %12 = arith.addf %10, %11 : vector<1x128xf32>
    %c0_11 = arith.constant 0 : index
    %c0_12 = arith.constant 0 : index
    %13 = vector.load %arg4[%c0_11, %c0_12] : memref<2x128xf32, #tpu.memory_space<vmem>>, vector<2x128xf32>
    %14 = vector.extract_strided_slice %4 {offsets = [0, 0], sizes = [64, 1], strides = [1, 1]} : vector<64x2xf32> to vector<64x1xf32>
    %15 = vector.extract_strided_slice %13 {offsets = [0, 0], sizes = [1, 128], strides = [1, 1]} : vector<2x128xf32> to vector<1x128xf32>
    %16 = vector.broadcast %14 : vector<64x1xf32> to vector<64x128xf32>
    %17 = vector.broadcast %15 : vector<1x128xf32> to vector<64x128xf32>
    %18 = arith.mulf %16, %17 : vector<64x128xf32>
    %19 = vector.broadcast %12 : vector<1x128xf32> to vector<64x128xf32>
    %20 = arith.addf %19, %18 : vector<64x128xf32>
    %21 = vector.extract_strided_slice %4 {offsets = [0, 1], sizes = [64, 1], strides = [1, 1]} : vector<64x2xf32> to vector<64x1xf32>
    %22 = vector.extract_strided_slice %13 {offsets = [1, 0], sizes = [1, 128], strides = [1, 1]} : vector<2x128xf32> to vector<1x128xf32>
    %23 = vector.broadcast %21 : vector<64x1xf32> to vector<64x128xf32>
    %24 = vector.broadcast %22 : vector<1x128xf32> to vector<64x128xf32>
    %25 = arith.mulf %23, %24 : vector<64x128xf32>
    %26 = arith.addf %20, %25 : vector<64x128xf32>
    %cst_13 = arith.constant 0.00999999977 : f32
    %27 = vector.broadcast %cst_13 : f32 to vector<64x128xf32>
    %28 = arith.mulf %27, %26 : vector<64x128xf32>
    %29 = arith.maximumf %26, %28 : vector<64x128xf32>
    %30 = arith.truncf %29 : vector<64x128xf32> to vector<64x128xbf16>
    %c0_14 = arith.constant 0 : index
    %c0_15 = arith.constant 0 : index
    %31 = vector.load %arg7[%c0_14, %c0_15] : memref<128x128xbf16, #tpu.memory_space<vmem>>, vector<128x128xbf16>
    %cst_16 = arith.constant dense<0.000000e+00> : vector<64x128xf32>
    %32 = tpu.matmul %30, %31, %cst_16 {dimension_numbers = #tpu.dot_dimension_numbers<[1], [0], [0], [1], [0, 0, 1, 1], [], []>} : vector<64x128xbf16>, vector<128x128xbf16>, vector<64x128xf32> -> vector<64x128xf32>
    %c0_17 = arith.constant 0 : index
    %c0_18 = arith.constant 0 : index
    %33 = vector.load %arg8[%c0_17, %c0_18] : memref<1x128xf32, #tpu.memory_space<vmem>>, vector<1x128xf32>
    %34 = vector.broadcast %33 : vector<1x128xf32> to vector<64x128xf32>
    %35 = arith.addf %32, %34 : vector<64x128xf32>
    %cst_19 = arith.constant 0.00999999977 : f32
    %36 = vector.broadcast %cst_19 : f32 to vector<64x128xf32>
    %37 = arith.mulf %36, %35 : vector<64x128xf32>
    %38 = arith.maximumf %35, %37 : vector<64x128xf32>
    %39 = arith.truncf %38 : vector<64x128xf32> to vector<64x128xbf16>
    %c0_20 = arith.constant 0 : index
    %c0_21 = arith.constant 0 : index
    %40 = vector.load %arg9[%c0_20, %c0_21] : memref<128x2xbf16, #tpu.memory_space<vmem>>, vector<128x2xbf16>
    %cst_22 = arith.constant dense<0.000000e+00> : vector<64x2xf32>
    %41 = tpu.matmul %39, %40, %cst_22 {dimension_numbers = #tpu.dot_dimension_numbers<[1], [0], [0], [1], [0, 0, 1, 1], [], []>} : vector<64x128xbf16>, vector<128x2xbf16>, vector<64x2xf32> -> vector<64x2xf32>
    %c0_23 = arith.constant 0 : index
    %c0_24 = arith.constant 0 : index
    %42 = vector.load %arg10[%c0_23, %c0_24] : memref<1x2xf32, #tpu.memory_space<vmem>>, vector<1x2xf32>
    %43 = vector.broadcast %42 : vector<1x2xf32> to vector<64x2xf32>
    %44 = arith.addf %41, %43 : vector<64x2xf32>
    %45 = math.tanh %44 : vector<64x2xf32>
    %c0_25 = arith.constant 0 : index
    %c0_26 = arith.constant 0 : index
    %46 = vector.load %arg11[%c0_25, %c0_26] : memref<64x2xf32, #tpu.memory_space<vmem>>, vector<64x2xf32>
    tpu.vector_store %arg11[%c0_25, %c0_26], %45 {strides = array<i32>} : memref<64x2xf32, #tpu.memory_space<vmem>>, vector<64x2xf32>,
    return
  }
  func.func @transform_0(%arg0: i32, %arg1: i32) -> (i32, i32) {
    %c0_i32 = arith.constant 0 : i32
    %c0_i32_0 = arith.constant 0 : i32
    return %arg1, %c0_i32 : i32, i32
  }
  func.func @transform_1(%arg0: i32, %arg1: i32) -> (i32, i32, i32) {
    %c0_i32 = arith.constant 0 : i32
    %c0_i32_0 = arith.constant 0 : i32
    %c0_i32_1 = arith.constant 0 : i32
    return %arg0, %c0_i32, %c0_i32_0 : i32, i32, i32
  }
  func.func @transform_2(%arg0: i32, %arg1: i32) -> (i32, i32) {
    %c0_i32 = arith.constant 0 : i32
    %c0_i32_0 = arith.constant 0 : i32
    %c0_i32_1 = arith.constant 0 : i32
    return %c0_i32, %c0_i32_0 : i32, i32
  }
  func.func @transform_3(%arg0: i32, %arg1: i32) -> (i32, i32) {
    %c0_i32 = arith.constant 0 : i32
    %c0_i32_0 = arith.constant 0 : i32
    %c0_i32_1 = arith.constant 0 : i32
    return %c0_i32, %c0_i32_0 : i32, i32
  }
  func.func @transform_4(%arg0: i32, %arg1: i32) -> (i32, i32) {
    %c0_i32 = arith.constant 0 : i32
    %c0_i32_0 = arith.constant 0 : i32
    %c0_i32_1 = arith.constant 0 : i32
    return %c0_i32, %c0_i32_0 : i32, i32
  }
  func.func @transform_5(%arg0: i32, %arg1: i32) -> (i32, i32) {
    %c0_i32 = arith.constant 0 : i32
    %c0_i32_0 = arith.constant 0 : i32
    %c0_i32_1 = arith.constant 0 : i32
    return %c0_i32, %c0_i32_0 : i32, i32
  }
  func.func @transform_6(%arg0: i32, %arg1: i32) -> (i32, i32) {
    %c0_i32 = arith.constant 0 : i32
    %c0_i32_0 = arith.constant 0 : i32
    %c0_i32_1 = arith.constant 0 : i32
    return %c0_i32, %c0_i32_0 : i32, i32
  }
  func.func @transform_7(%arg0: i32, %arg1: i32) -> (i32, i32) {
    %c0_i32 = arith.constant 0 : i32
    %c0_i32_0 = arith.constant 0 : i32
    %c0_i32_1 = arith.constant 0 : i32
    return %c0_i32, %c0_i32_0 : i32, i32
  }
  func.func @transform_8(%arg0: i32, %arg1: i32) -> (i32, i32) {
    %c0_i32 = arith.constant 0 : i32
    %c0_i32_0 = arith.constant 0 : i32
    %c0_i32_1 = arith.constant 0 : i32
    return %c0_i32, %c0_i32_0 : i32, i32
  }
  func.func @transform_9(%arg0: i32, %arg1: i32) -> (i32, i32) {
    %c2_i32 = arith.constant 2 : i32
    %0 = arith.muli %arg0, %c2_i32 : i32
    %1 = arith.addi %0, %arg1 : i32
    %c0_i32 = arith.constant 0 : i32
    %c0_i32_0 = arith.constant 0 : i32
    return %1, %c0_i32 : i32, i32
  }
}

</mosaic_0001>

<llo_original>
// kernel: tpu_custom_call.1
$region0: #{tpu_custom_call.1}
  #allocation0 [shape = 'u32[]', space=smem, size = 0x4, offset = 0x4, fixed_abs, tag = 'smem constant byte address 0x4 - core index']
  #allocation1 [shape = 'u32[144,128]{1,0:T(1,128)}', space=vmem, size = 0x12000, scoped, tag = 'internal scratch']
  %s0 = inlined_call_operand.vmem [shape: f32[128,2], index: 0, kind: input, shape index: {}]
  %s1 = inlined_call_operand.vmem [shape: f32[1,1,16], index: 1, kind: input, shape index: {}]
  %s2 = inlined_call_operand.vmem [shape: f32[2,128], index: 2, kind: input, shape index: {}]
  %s3 = inlined_call_operand.vmem [shape: f32[16,128], index: 3, kind: input, shape index: {}]
  %s4 = inlined_call_operand.vmem [shape: f32[1,128], index: 4, kind: input, shape index: {}]
  %s5 = inlined_call_operand.vmem [shape: bf16[128,128], index: 5, kind: input, shape index: {}]
  %s6 = inlined_call_operand.vmem [shape: f32[1,128], index: 6, kind: input, shape index: {}]
  %s7 = inlined_call_operand.vmem [shape: bf16[128,2], index: 7, kind: input, shape index: {}]
  %s8 = inlined_call_operand.vmem [shape: f32[1,2], index: 8, kind: input, shape index: {}]
  %s9 = inlined_call_operand.vmem [shape: f32[128,2], index: 9, kind: output, shape index: {}]
  %s10 = sld [smem:[#allocation0]]
  $region69: #{tpu_custom_call.1} parent=0
    _
  %s12 = ssub.s32 1, %s10
  %s13 = scalar_select 0, %s12, %s10
  loop: start=0, step=1, limit=4
  $region2: #{tpu_custom_call.1} parent=0 // loop_pre_header
    _
  $region3: #{tpu_custom_call.1} parent=0 // loop_header
    %s15 = sphi 0, %s19
    %p16 = scmp.ge.s32.totalorder %s15, 4
    %s22 = sphi 0, %s34
    %s23 = sphi 0, %s30
    %s24 = sphi 0, %s22
    %s25 = sphi 0, %s23
    %s26 = sphi 0, %s24
    %s27 = sphi 0, %s25
    %s37 = sphi 0, %s39
    %s40 = sphi 0, %s37
    %s41 = sphi 0, %s40
    %s57 = sphi 0, %s41
    %s63 = sphi 0, %s65
    %s66 = sphi 0, %s63
    %s67 = sphi 0, %s66
    %s83 = sphi 0, %s67
    %s87 = sphi 0, %s87
    %s89 = sphi 0, %s87
    %s90 = sphi 0, %s89
    %s104 = sphi 0, %s90
    %s108 = sphi 0, %s108
    %s110 = sphi 0, %s108
    %s111 = sphi 0, %s110
    %s125 = sphi 0, %s111
    %s129 = sphi 0, %s129
    %s131 = sphi 0, %s129
    %s132 = sphi 0, %s131
    %s146 = sphi 0, %s132
    %s150 = sphi 0, %s150
    %s152 = sphi 0, %s150
    %s153 = sphi 0, %s152
    %s167 = sphi 0, %s153
    %s171 = sphi 0, %s171
    %s173 = sphi 0, %s171
    %s174 = sphi 0, %s173
    %s188 = sphi 0, %s174
    %s192 = sphi 0, %s192
    %s194 = sphi 0, %s192
    %s195 = sphi 0, %s194
    %s209 = sphi 0, %s195
    %s213 = sphi 0, %s213
    %s215 = sphi 0, %s213
    %s216 = sphi 0, %s215
    %s230 = sphi 0, %s216
    %s240 = sphi 0, %s242
    %s243 = sphi 0, %s240
    %s244 = sphi 0, %s243
    %s260 = sphi 0, %s244
  $region4: #{tpu_custom_call.1} parent=0 // loop_header_branch
    %18 = sbr.rel (%p16) target = $region8
  $region5: #{tpu_custom_call.1} parent=0 // loop_body
    %s20 = ssub.s32 %s15, 1
    %s21 = ssub.s32 %s15, 2
    %s28 = sadd.s32 1, %s23
    %p29 = scmp.ge.s32.totalorder %s28, 2
    %s30 = scalar_select %p29, 0, %s28
    %s31 = sadd.s32 1, %s22
    %s32 = scalar_select %p29, %s31, %s22
    %p33 = scmp.ge.s32.totalorder %s32, 1
    %s34 = scalar_select %p33, 0, %s32
    %s35 = ssub.s32 %s23, %s30
    %p36 = scmp.eq.s32.totalorder %s35, 0
    %s38 = sadd.s32 %s37, 1
    %s39 = scalar_select %p36, %s37, %s38
    %p42 = pneg %p36
    %p43 = scmp.eq.s32.totalorder %s15, 1
    %p44 = por %p42, %p43
    %p45 = scmp.ne.s32.totalorder %s37, %s40
    %p46 = scmp.eq.s32.totalorder %s15, 0
    %p47 = por %p45, %p46
    %p48 = scmp.ne.s32.totalorder %s37, %s40
    %p49 = scmp.eq.s32.totalorder %s20, 1
    %p50 = por %p48, %p49
    %p51 = scmp.ne.s32.totalorder %s40, %s41
    %p52 = scmp.eq.s32.totalorder %s20, 0
    %p53 = por %p51, %p52
    %p54 = scmp.ne.s32.totalorder %s40, %s41
    %p55 = scmp.eq.s32.totalorder %s21, 1
    %p56 = por %p54, %p55
    %p58 = scmp.ne.s32.totalorder %s41, %s57
    %p59 = scmp.eq.s32.totalorder %s21, 0
    %p60 = por %p58, %p59
    %s61 = ssub.s32 %s22, %s34
    %p62 = scmp.eq.s32.totalorder %s61, 0
    %s64 = sadd.s32 %s63, 1
    %s65 = scalar_select %p62, %s63, %s64
    %p68 = pneg %p62
    %p69 = scmp.eq.s32.totalorder %s15, 1
    %p70 = por %p68, %p69
    %p71 = scmp.ne.s32.totalorder %s63, %s66
    %p72 = scmp.eq.s32.totalorder %s15, 0
    %p73 = por %p71, %p72
    %p74 = scmp.ne.s32.totalorder %s63, %s66
    %p75 = scmp.eq.s32.totalorder %s20, 1
    %p76 = por %p74, %p75
    %p77 = scmp.ne.s32.totalorder %s66, %s67
    %p78 = scmp.eq.s32.totalorder %s20, 0
    %p79 = por %p77, %p78
    %p80 = scmp.ne.s32.totalorder %s66, %s67
    %p81 = scmp.eq.s32.totalorder %s21, 1
    %p82 = por %p80, %p81
    %p84 = scmp.ne.s32.totalorder %s67, %s83
    %p85 = scmp.eq.s32.totalorder %s21, 0
    %p86 = por %p84, %p85
    %s88 = sadd.s32 %s87, 1
    %p91 = scmp.eq.s32.totalorder %s15, 1
    %p92 = scmp.ne.s32.totalorder %s87, %s89
    %p93 = scmp.eq.s32.totalorder %s15, 0
    %p94 = por %p92, %p93
    %p95 = scmp.ne.s32.totalorder %s87, %s89
    %p96 = scmp.eq.s32.totalorder %s20, 1
    %p97 = por %p95, %p96
    %p98 = scmp.ne.s32.totalorder %s89, %s90
    %p99 = scmp.eq.s32.totalorder %s20, 0
    %p100 = por %p98, %p99
    %p101 = scmp.ne.s32.totalorder %s89, %s90
    %p102 = scmp.eq.s32.totalorder %s21, 1
    %p103 = por %p101, %p102
    %p105 = scmp.ne.s32.totalorder %s90, %s104
    %p106 = scmp.eq.s32.totalorder %s21, 0
    %p107 = por %p105, %p106
    %s109 = sadd.s32 %s108, 1
    %p112 = scmp.eq.s32.totalorder %s15, 1
    %p113 = scmp.ne.s32.totalorder %s108, %s110
    %p114 = scmp.eq.s32.totalorder %s15, 0
    %p115 = por %p113, %p114
    %p116 = scmp.ne.s32.totalorder %s108, %s110
    %p117 = scmp.eq.s32.totalorder %s20, 1
    %p118 = por %p116, %p117
    %p119 = scmp.ne.s32.totalorder %s110, %s111
    %p120 = scmp.eq.s32.totalorder %s20, 0
    %p121 = por %p119, %p120
    %p122 = scmp.ne.s32.totalorder %s110, %s111
    %p123 = scmp.eq.s32.totalorder %s21, 1
    %p124 = por %p122, %p123
    %p126 = scmp.ne.s32.totalorder %s111, %s125
    %p127 = scmp.eq.s32.totalorder %s21, 0
    %p128 = por %p126, %p127
    %s130 = sadd.s32 %s129, 1
    %p133 = scmp.eq.s32.totalorder %s15, 1
    %p134 = scmp.ne.s32.totalorder %s129, %s131
    %p135 = scmp.eq.s32.totalorder %s15, 0
    %p136 = por %p134, %p135
    %p137 = scmp.ne.s32.totalorder %s129, %s131
    %p138 = scmp.eq.s32.totalorder %s20, 1
    %p139 = por %p137, %p138
    %p140 = scmp.ne.s32.totalorder %s131, %s132
    %p141 = scmp.eq.s32.totalorder %s20, 0
    %p142 = por %p140, %p141
    %p143 = scmp.ne.s32.totalorder %s131, %s132
    %p144 = scmp.eq.s32.totalorder %s21, 1
    %p145 = por %p143, %p144
    %p147 = scmp.ne.s32.totalorder %s132, %s146
    %p148 = scmp.eq.s32.totalorder %s21, 0
    %p149 = por %p147, %p148
    %s151 = sadd.s32 %s150, 1
    %p154 = scmp.eq.s32.totalorder %s15, 1
    %p155 = scmp.ne.s32.totalorder %s150, %s152
    %p156 = scmp.eq.s32.totalorder %s15, 0
    %p157 = por %p155, %p156
    %p158 = scmp.ne.s32.totalorder %s150, %s152
    %p159 = scmp.eq.s32.totalorder %s20, 1
    %p160 = por %p158, %p159
    %p161 = scmp.ne.s32.totalorder %s152, %s153
    %p162 = scmp.eq.s32.totalorder %s20, 0
    %p163 = por %p161, %p162
    %p164 = scmp.ne.s32.totalorder %s152, %s153
    %p165 = scmp.eq.s32.totalorder %s21, 1
    %p166 = por %p164, %p165
    %p168 = scmp.ne.s32.totalorder %s153, %s167
    %p169 = scmp.eq.s32.totalorder %s21, 0
    %p170 = por %p168, %p169
    %s172 = sadd.s32 %s171, 1
    %p175 = scmp.eq.s32.totalorder %s15, 1
    %p176 = scmp.ne.s32.totalorder %s171, %s173
    %p177 = scmp.eq.s32.totalorder %s15, 0
    %p178 = por %p176, %p177
    %p179 = scmp.ne.s32.totalorder %s171, %s173
    %p180 = scmp.eq.s32.totalorder %s20, 1
    %p181 = por %p179, %p180
    %p182 = scmp.ne.s32.totalorder %s173, %s174
    %p183 = scmp.eq.s32.totalorder %s20, 0
    %p184 = por %p182, %p183
    %p185 = scmp.ne.s32.totalorder %s173, %s174
    %p186 = scmp.eq.s32.totalorder %s21, 1
    %p187 = por %p185, %p186
    %p189 = scmp.ne.s32.totalorder %s174, %s188
    %p190 = scmp.eq.s32.totalorder %s21, 0
    %p191 = por %p189, %p190
    %s193 = sadd.s32 %s192, 1
    %p196 = scmp.eq.s32.totalorder %s15, 1
    %p197 = scmp.ne.s32.totalorder %s192, %s194
    %p198 = scmp.eq.s32.totalorder %s15, 0
    %p199 = por %p197, %p198
    %p200 = scmp.ne.s32.totalorder %s192, %s194
    %p201 = scmp.eq.s32.totalorder %s20, 1
    %p202 = por %p200, %p201
    %p203 = scmp.ne.s32.totalorder %s194, %s195
    %p204 = scmp.eq.s32.totalorder %s20, 0
    %p205 = por %p203, %p204
    %p206 = scmp.ne.s32.totalorder %s194, %s195
    %p207 = scmp.eq.s32.totalorder %s21, 1
    %p208 = por %p206, %p207
    %p210 = scmp.ne.s32.totalorder %s195, %s209
    %p211 = scmp.eq.s32.totalorder %s21, 0
    %p212 = por %p210, %p211
    %s214 = sadd.s32 %s213, 1
    %p217 = scmp.eq.s32.totalorder %s15, 1
    %p218 = scmp.ne.s32.totalorder %s213, %s215
    %p219 = scmp.eq.s32.totalorder %s15, 0
    %p220 = por %p218, %p219
    %p221 = scmp.ne.s32.totalorder %s213, %s215
    %p222 = scmp.eq.s32.totalorder %s20, 1
    %p223 = por %p221, %p222
    %p224 = scmp.ne.s32.totalorder %s215, %s216
    %p225 = scmp.eq.s32.totalorder %s20, 0
    %p226 = por %p224, %p225
    %p227 = scmp.ne.s32.totalorder %s215, %s216
    %p228 = scmp.eq.s32.totalorder %s21, 1
    %p229 = por %p227, %p228
    %p231 = scmp.ne.s32.totalorder %s216, %s230
    %p232 = scmp.eq.s32.totalorder %s21, 0
    %p233 = por %p231, %p232
    %s234 = smul.u32 %s22, 2
    %s235 = sadd.s32 %s234, %s23
    %s236 = smul.u32 %s34, 2
    %s237 = sadd.s32 %s236, %s30
    %s238 = ssub.s32 %s235, %s237
    %p239 = scmp.eq.s32.totalorder %s238, 0
    %s241 = sadd.s32 %s240, 1
    %s242 = scalar_select %p239, %s240, %s241
    %p245 = pneg %p239
    %p246 = scmp.eq.s32.totalorder %s15, 1
    %p247 = por %p245, %p246
    %p248 = scmp.ne.s32.totalorder %s240, %s243
    %p249 = scmp.eq.s32.totalorder %s15, 0
    %p250 = por %p248, %p249
    %p251 = scmp.ne.s32.totalorder %s240, %s243
    %p252 = scmp.eq.s32.totalorder %s20, 1
    %p253 = por %p251, %p252
    %p254 = scmp.ne.s32.totalorder %s243, %s244
    %p255 = scmp.eq.s32.totalorder %s20, 0
    %p256 = por %p254, %p255
    %p257 = scmp.ne.s32.totalorder %s243, %s244
    %p258 = scmp.eq.s32.totalorder %s21, 1
    %p259 = por %p257, %p258
    %p261 = scmp.ne.s32.totalorder %s244, %s260
    %p262 = scmp.eq.s32.totalorder %s21, 0
    %p263 = por %p261, %p262
    %p264 = scmp.le.s32.totalorder 1, %s15
    %p265 = scmp.lt.s32.totalorder %s15, 3
    %p266 = pnand %p264, %p265
    %p267 = pneg %p266
    // Predicated region
    $region9: #{tpu_custom_call.1} parent=5 // pred_check
      _
    $region10: #{tpu_custom_call.1} parent=5 // pred_check_branch
      %269 = sbr.rel (%p266) target = $region12
    $region11: #{tpu_custom_call.1} parent=5 // pred_region
      %s270 = ssub.s32 %s15, 1
      // Predicated region
      $region13: #{tpu_custom_call.1} parent=11 // pred_check
        %p271 = pneg %p79
      $region14: #{tpu_custom_call.1} parent=11 // pred_check_branch
        %273 = sbr.rel (%p271) target = $region16
      $region15: #{tpu_custom_call.1} parent=11 // pred_region
        %p274 = scmp.lt.s32.totalorder %s24, 0
        %s275 = scalar_select %p274, %s24, 0
        %s276 = scalar_lea.vmem %s1, %s275
      $region16: #{tpu_custom_call.1} parent=11 // pred_fallthru
        _
      // Predicated region
      $region17: #{tpu_custom_call.1} parent=11 // pred_check
        %p277 = pneg %p100
      $region18: #{tpu_custom_call.1} parent=11 // pred_check_branch
        %279 = sbr.rel (%p277) target = $region20
      $region19: #{tpu_custom_call.1} parent=11 // pred_region
        _
      $region20: #{tpu_custom_call.1} parent=11 // pred_fallthru
        _
      // Predicated region
      $region21: #{tpu_custom_call.1} parent=11 // pred_check
        %p280 = pneg %p121
      $region22: #{tpu_custom_call.1} parent=11 // pred_check_branch
        %282 = sbr.rel (%p280) target = $region24
      $region23: #{tpu_custom_call.1} parent=11 // pred_region
        _
      $region24: #{tpu_custom_call.1} parent=11 // pred_fallthru
        _
      // Predicated region
      $region25: #{tpu_custom_call.1} parent=11 // pred_check
        %p283 = pneg %p142
      $region26: #{tpu_custom_call.1} parent=11 // pred_check_branch
        %285 = sbr.rel (%p283) target = $region28
      $region27: #{tpu_custom_call.1} parent=11 // pred_region
        _
      $region28: #{tpu_custom_call.1} parent=11 // pred_fallthru
        _
      // Predicated region
      $region29: #{tpu_custom_call.1} parent=11 // pred_check
        %p286 = pneg %p163
      $region30: #{tpu_custom_call.1} parent=11 // pred_check_branch
        %288 = sbr.rel (%p286) target = $region32
      $region31: #{tpu_custom_call.1} parent=11 // pred_region
        _
      $region32: #{tpu_custom_call.1} parent=11 // pred_fallthru
        _
      // Predicated region
      $region33: #{tpu_custom_call.1} parent=11 // pred_check
        %p289 = pneg %p184
      $region34: #{tpu_custom_call.1} parent=11 // pred_check_branch
        %291 = sbr.rel (%p289) target = $region36
      $region35: #{tpu_custom_call.1} parent=11 // pred_region
        _
      $region36: #{tpu_custom_call.1} parent=11 // pred_fallthru
        _
      // Predicated region
      $region37: #{tpu_custom_call.1} parent=11 // pred_check
        %p292 = pneg %p205
      $region38: #{tpu_custom_call.1} parent=11 // pred_check_branch
        %294 = sbr.rel (%p292) target = $region40
      $region39: #{tpu_custom_call.1} parent=11 // pred_region
        _
      $region40: #{tpu_custom_call.1} parent=11 // pred_fallthru
        _
      // Predicated region
      $region41: #{tpu_custom_call.1} parent=11 // pred_check
        %p295 = pneg %p226
      $region42: #{tpu_custom_call.1} parent=11 // pred_check_branch
        %297 = sbr.rel (%p295) target = $region44
      $region43: #{tpu_custom_call.1} parent=11 // pred_region
        _
      $region44: #{tpu_custom_call.1} parent=11 // pred_fallthru
        _
    $region12: #{tpu_custom_call.1} parent=5 // pred_fallthru
      _
    %p298 = scmp.lt.s32.totalorder %s15, 2
    // Predicated region
    $region45: #{tpu_custom_call.1} parent=5 // pred_check
      %p299 = pneg %p298
    $region46: #{tpu_custom_call.1} parent=5 // pred_check_branch
      %301 = sbr.rel (%p299) target = $region48
    $region47: #{tpu_custom_call.1} parent=5 // pred_region
      // Predicated region
      $region49: #{tpu_custom_call.1} parent=47 // pred_check
        %p302 = pneg %p47
      $region50: #{tpu_custom_call.1} parent=47 // pred_check_branch
        %304 = sbr.rel (%p302) target = $region52
      $region51: #{tpu_custom_call.1} parent=47 // pred_region
        %s305 = smul.u32 8, %s23
        %p306 = scmp.lt.s32.totalorder %s305, 15
        %s307 = scalar_select %p306, %s305, 15
        %s308 = smul.addr %s307, 8
        %s309 = scalar_lea.vmem %s0, %s308
        %s310 = smul.u32 8, %s23
      $region52: #{tpu_custom_call.1} parent=47 // pred_fallthru
        _
    $region48: #{tpu_custom_call.1} parent=5 // pred_fallthru
      _
    %p311 = scmp.le.s32.totalorder 1, %s15
    %p312 = scmp.lt.s32.totalorder %s15, 3
    %p313 = pnand %p311, %p312
    %p314 = pneg %p313
    // Predicated region
    $region53: #{tpu_custom_call.1} parent=5 // pred_check
      _
    $region54: #{tpu_custom_call.1} parent=5 // pred_check_branch
      %316 = sbr.rel (%p313) target = $region56
    $region55: #{tpu_custom_call.1} parent=5 // pred_region
      %s317 = ssub.s32 %s15, 1
      %s318 = smul.u32 8, %s25
      %p319 = scmp.lt.s32.totalorder %s318, 15
      %s320 = scalar_select %p319, %s318, 15
      %s321 = smul.addr %s320, 8
      %s322 = scalar_lea.vmem %s0, %s321
      %p323 = pneg %p53
      %p324 = pneg %p50
      %p325 = scmp.lt.s32.totalorder %s24, 0
      %s326 = scalar_select %p325, %s24, 0
      %s327 = scalar_lea.vmem %s1, %s326
      %p328 = pneg %p79
      %p329 = pneg %p76
      %p330 = pneg %p100
      %p331 = pneg %p97
      %p332 = pneg %p121
      %p333 = pneg %p118
      %p334 = pneg %p142
      %p335 = pneg %p139
      %p336 = pneg %p163
      %p337 = pneg %p160
      %p338 = pneg %p184
      %p339 = pneg %p181
      %p340 = pneg %p205
      %p341 = pneg %p202
      %p342 = pneg %p226
      %p343 = pneg %p223
      %p344 = pneg %p256
      %p345 = pneg %p253
      %s346 = smul.u32 %s24, 2
      %s347 = sadd.s32 %s346, %s25
      %s348 = smul.u32 8, %s347
      %p349 = scmp.lt.s32.totalorder %s348, 15
      %s350 = scalar_select %p349, %s348, 15
      %s351 = smul.addr %s350, 8
      %s352 = scalar_lea.vmem %s9, %s351
      %s353 = smul.u32 8, %s25
      %p354 = scmp.lt.s32.totalorder %s353, 15
      %s355 = scalar_select %p354, %s353, 15
      %s356 = smul.addr %s355, 8
      %s357 = scalar_lea.vmem %s0, %s356
      %s358 = smul.u32 8, %s25
      %p359 = scmp.lt.s32.totalorder %s24, 0
      %s360 = scalar_select %p359, %s24, 0
      %s361 = scalar_lea.vmem %s1, %s360
      %s362 = smul.u32 %s24, 2
      %s363 = sadd.s32 %s362, %s25
      %s364 = smul.u32 8, %s363
      %p365 = scmp.lt.s32.totalorder %s364, 15
      %s366 = scalar_select %p365, %s364, 15
      %s367 = smul.addr %s366, 8
      %s368 = scalar_lea.vmem %s9, %s367
      %s369 = smul.u32 %s24, 2
      %s370 = sadd.s32 %s369, %s25
      %s371 = smul.u32 8, %s370
      %v373 = vld [vmem:[%s357] sm:$0xff]
      %v374 = vld [vmem:[%s357 + $0x8] sm:$0xff]
      %v375 = vld [vmem:[%s357 + $0x10] sm:$0xff]
      %v376 = vld [vmem:[%s357 + $0x18] sm:$0xff]
      %v377 = vld [vmem:[%s357 + $0x20] sm:$0xff]
      %v378 = vld [vmem:[%s357 + $0x28] sm:$0xff]
      %v379 = vld [vmem:[%s357 + $0x30] sm:$0xff]
      %v380 = vld [vmem:[%s357 + $0x38] sm:$0xff]
      %v381 = vmul.f32 %v373, 2.0
      %v382 = vmul.f32 %v374, 2.0
      %v383 = vmul.f32 %v375, 2.0
      %v384 = vmul.f32 %v376, 2.0
      %v385 = vmul.f32 %v377, 2.0
      %v386 = vmul.f32 %v378, 2.0
      %v387 = vmul.f32 %v379, 2.0
      %v388 = vmul.f32 %v380, 2.0
      %v389 = vadd.f32 %v381, -1.0
      %v390 = vadd.f32 %v382, -1.0
      %v391 = vadd.f32 %v383, -1.0
      %v392 = vadd.f32 %v384, -1.0
      %v393 = vadd.f32 %v385, -1.0
      %v394 = vadd.f32 %v386, -1.0
      %v395 = vadd.f32 %v387, -1.0
      %v396 = vadd.f32 %v388, -1.0
      %v397 = vld [vmem:[%s361] sm:$0x1]
      %v398 = vmul.f32 %v397, 16.0
      %v399 = vld [vmem:[%s3] sm:$0xff]
      %v400 = vld [vmem:[%s3 + $0x8] sm:$0xff]
      %v401 = vld [vmem:[%s4] sm:$0x1]
      %vm402 = vcmask 130048
      %v404 = vsel %vm402, %v398, 0
      %406 = vmatprep.subr.mxu0 0.0
      %407 = vmatpush1.msra.mxu0 0.0
      %408 = vmatprep.subr.mxu0 0.0
      %409 = vmatpush1.msra.mxu0 0.0
      %410 = vmatprep.subr.mxu0 0.0
      %411 = vmatpush1.msra.mxu0 0.0
      %412 = vmatprep.subr.mxu0 0.0
      %413 = vmatpush1.msra.mxu0 0.0
      %414 = vmatprep.subr.mxu0 0.0
      %415 = vmatpush1.msra.mxu0 0.0
      %416 = vmatprep.subr.mxu0 0.0
      %417 = vmatpush1.msra.mxu0 0.0
      %418 = vmatprep.subr.mxu0 0.0
      %419 = vmatpush1.msra.mxu0 0.0
      %420 = vmatprep.subr.mxu0 0.0
      %421 = vmatpush1.msra.mxu0 0.0
      %422 = vmatprep.subr.mxu0 0.0
      %423 = vmatpush1.msra.mxu0 0.0
      %424 = vmatprep.subr.mxu0 0.0
      %425 = vmatpush1.msra.mxu0 0.0
      %426 = vmatprep.subr.mxu0 0.0
      %427 = vmatpush1.msra.mxu0 0.0
      %428 = vmatprep.subr.mxu0 0.0
      %429 = vmatpush1.msra.mxu0 0.0
      %430 = vmatprep.subr.mxu0 0.0
      %431 = vmatpush1.msra.mxu0 0.0
      %432 = vmatprep.subr.mxu0 0.0
      %433 = vmatpush1.msra.mxu0 0.0
      %434 = vmatprep.subr.mxu0 0.0
      %435 = vmatpush1.msra.mxu0 %v400
      %436 = vmatprep.subr.mxu0 0.0
      %437 = vmatpush1.msra.mxu0 %v399
      %438 = vmatprep.subr.mxu0 0.0
      %439 = vmatpush2.msra.mxu0 0.0
      %440 = vmatprep.subr.mxu0 0.0
      %441 = vmatpush2.msra.mxu0 0.0
      %442 = vmatprep.subr.mxu0 0.0
      %443 = vmatpush2.msra.mxu0 0.0
      %444 = vmatprep.subr.mxu0 0.0
      %445 = vmatpush2.msra.mxu0 0.0
      %446 = vmatprep.subr.mxu0 0.0
      %447 = vmatpush2.msra.mxu0 0.0
      %448 = vmatprep.subr.mxu0 0.0
      %449 = vmatpush2.msra.mxu0 0.0
      %450 = vmatprep.subr.mxu0 0.0
      %451 = vmatpush2.msra.mxu0 0.0
      %452 = vmatprep.subr.mxu0 0.0
      %453 = vmatpush2.msra.mxu0 0.0
      %454 = vmatprep.subr.mxu0 0.0
      %455 = vmatpush2.msra.mxu0 0.0
      %456 = vmatprep.subr.mxu0 0.0
      %457 = vmatpush2.msra.mxu0 0.0
      %458 = vmatprep.subr.mxu0 0.0
      %459 = vmatpush2.msra.mxu0 0.0
      %460 = vmatprep.subr.mxu0 0.0
      %461 = vmatpush2.msra.mxu0 0.0
      %462 = vmatprep.subr.mxu0 0.0
      %463 = vmatpush2.msra.mxu0 0.0
      %464 = vmatprep.subr.mxu0 0.0
      %465 = vmatpush2.msra.mxu0 0.0
      %466 = vmatprep.subr.mxu0 0.0
      %467 = vmatpush2.msra.mxu0 0.0
      %468 = vmatprep.subr.mxu0 0.0
      %469 = vmatpush2.msra.mxu0 0.0
      %470 = vmatprep.mubr.f32.mxu0 0.0
      %471 = vmatmul.mubr.f32.gmra.mxu0 %v404
      %v472 = vpop.f32.mrf.mxu0
      %v473 = vadd.f32 %v401, %v472
      %v474 = vpop.f32.mrf.mxu0
      %475 = vdwg.mxu0
      %v476 = vld [vmem:[%s2] sm:$0x3]
      %478 = vset.pattern.permute.xlu0 0
      %479 = vperm.xlu0 %478, %v389
      %v480 = vpop.permute.xlu0 %479
      %483 = vset.pattern.permute.xlu0 0
      %484 = vperm.xlu0 %483, %v390
      %v485 = vpop.permute.xlu0 %484
      %488 = vset.pattern.permute.xlu0 0
      %489 = vperm.xlu0 %488, %v391
      %v490 = vpop.permute.xlu0 %489
      %493 = vset.pattern.permute.xlu0 0
      %494 = vperm.xlu0 %493, %v392
      %v495 = vpop.permute.xlu0 %494
      %498 = vset.pattern.permute.xlu0 0
      %499 = vperm.xlu0 %498, %v393
      %v500 = vpop.permute.xlu0 %499
      %503 = vset.pattern.permute.xlu0 0
      %504 = vperm.xlu0 %503, %v394
      %v505 = vpop.permute.xlu0 %504
      %508 = vset.pattern.permute.xlu0 0
      %509 = vperm.xlu0 %508, %v395
      %v510 = vpop.permute.xlu0 %509
      %513 = vset.pattern.permute.xlu0 0
      %514 = vperm.xlu0 %513, %v396
      %v515 = vpop.permute.xlu0 %514
      %v517 = vlaneseq
      %v518 = vshrl.u32 %v517, 7
      %v519 = vsub.s32 0, %v518
      %v520 = vrot.slane %v476, %v519
      %v521 = vmul.f32 %v480, %v520
      %v522 = vmul.f32 %v485, %v520
      %v523 = vmul.f32 %v490, %v520
      %v524 = vmul.f32 %v495, %v520
      %v525 = vmul.f32 %v500, %v520
      %v526 = vmul.f32 %v505, %v520
      %v527 = vmul.f32 %v510, %v520
      %v528 = vmul.f32 %v515, %v520
      %v529 = vlaneseq
      %v530 = vshrl.u32 %v529, 7
      %v531 = vsub.s32 0, %v530
      %v532 = vrot.slane %v473, %v531
      %v533 = vadd.f32 %v532, %v521
      %v534 = vadd.f32 %v532, %v522
      %v535 = vadd.f32 %v532, %v523
      %v536 = vadd.f32 %v532, %v524
      %v537 = vadd.f32 %v532, %v525
      %v538 = vadd.f32 %v532, %v526
      %v539 = vadd.f32 %v532, %v527
      %v540 = vadd.f32 %v532, %v528
      %541 = vset.pattern.permute.xlu0 1
      %542 = vperm.xlu0 %541, %v389
      %v543 = vpop.permute.xlu0 %542
      %545 = vset.pattern.permute.xlu0 1
      %546 = vperm.xlu0 %545, %v390
      %v547 = vpop.permute.xlu0 %546
      %549 = vset.pattern.permute.xlu0 1
      %550 = vperm.xlu0 %549, %v391
      %v551 = vpop.permute.xlu0 %550
      %553 = vset.pattern.permute.xlu0 1
      %554 = vperm.xlu0 %553, %v392
      %v555 = vpop.permute.xlu0 %554
      %557 = vset.pattern.permute.xlu0 1
      %558 = vperm.xlu0 %557, %v393
      %v559 = vpop.permute.xlu0 %558
      %561 = vset.pattern.permute.xlu0 1
      %562 = vperm.xlu0 %561, %v394
      %v563 = vpop.permute.xlu0 %562
      %565 = vset.pattern.permute.xlu0 1
      %566 = vperm.xlu0 %565, %v395
      %v567 = vpop.permute.xlu0 %566
      %569 = vset.pattern.permute.xlu0 1
      %570 = vperm.xlu0 %569, %v396
      %v571 = vpop.permute.xlu0 %570
      %v573 = vlaneseq
      %v574 = vshrl.u32 %v573, 7
      %v575 = vsub.s32 1, %v574
      %v576 = vrot.slane %v476, %v575
      %v577 = vmul.f32 %v543, %v576
      %v578 = vmul.f32 %v547, %v576
      %v579 = vmul.f32 %v551, %v576
      %v580 = vmul.f32 %v555, %v576
      %v581 = vmul.f32 %v559, %v576
      %v582 = vmul.f32 %v563, %v576
      %v583 = vmul.f32 %v567, %v576
      %v584 = vmul.f32 %v571, %v576
      %v585 = vadd.f32 %v533, %v577
      %v586 = vadd.f32 %v534, %v578
      %v587 = vadd.f32 %v535, %v579
      %v588 = vadd.f32 %v536, %v580
      %v589 = vadd.f32 %v537, %v581
      %v590 = vadd.f32 %v538, %v582
      %v591 = vadd.f32 %v539, %v583
      %v592 = vadd.f32 %v540, %v584
      %v593 = vmul.f32 %v585, 0.01
      %v594 = vmul.f32 %v586, 0.01
      %v595 = vmul.f32 %v587, 0.01
      %v596 = vmul.f32 %v588, 0.01
      %v597 = vmul.f32 %v589, 0.01
      %v598 = vmul.f32 %v590, 0.01
      %v599 = vmul.f32 %v591, 0.01
      %v600 = vmul.f32 %v592, 0.01
      %v601 = vmax.f32 %v585, %v593
      %v602 = vmax.f32 %v586, %v594
      %v603 = vmax.f32 %v587, %v595
      %v604 = vmax.f32 %v588, %v596
      %v605 = vmax.f32 %v589, %v597
      %v606 = vmax.f32 %v590, %v598
      %v607 = vmax.f32 %v591, %v599
      %v608 = vmax.f32 %v592, %v600
      %v609 = vpack.c.bf16 %v602, %v601
      %v610 = vpack.c.bf16 %v604, %v603
      %v611 = vpack.c.bf16 %v606, %v605
      %v612 = vpack.c.bf16 %v608, %v607
      %v613 = vld [vmem:[%s5] sm:$0xf]
      %v614 = vld [vmem:[%s5 + $0x4] sm:$0xf]
      %v615 = vld [vmem:[%s5 + $0x8] sm:$0xf]
      %v616 = vld [vmem:[%s5 + $0xc] sm:$0xf]
      %v617 = vld [vmem:[%s5 + $0x10] sm:$0xf]
      %v618 = vld [vmem:[%s5 + $0x14] sm:$0xf]
      %v619 = vld [vmem:[%s5 + $0x18] sm:$0xf]
      %v620 = vld [vmem:[%s5 + $0x1c] sm:$0xf]
      %v621 = vld [vmem:[%s5 + $0x20] sm:$0xf]
      %v622 = vld [vmem:[%s5 + $0x24] sm:$0xf]
      %v623 = vld [vmem:[%s5 + $0x28] sm:$0xf]
      %v624 = vld [vmem:[%s5 + $0x2c] sm:$0xf]
      %v625 = vld [vmem:[%s5 + $0x30] sm:$0xf]
      %v626 = vld [vmem:[%s5 + $0x34] sm:$0xf]
      %v627 = vld [vmem:[%s5 + $0x38] sm:$0xf]
      %v628 = vld [vmem:[%s5 + $0x3c] sm:$0xf]
      %v629 = vld [vmem:[%s6] sm:$0x1]
      %v631 = vlaneseq
      %v632 = vshrl.u32 %v631, 7
      %v633 = vsub.s32 0, %v632
      %v634 = vrot.slane %v629, %v633
      %v652 = vunpack.c.l.b16 %v613
      %v653 = vunpack.c.l.b16 %v614
      %v654 = vunpack.c.l.b16 %v615
      %v655 = vunpack.c.l.b16 %v616
      %v656 = vunpack.c.l.b16 %v617
      %v657 = vunpack.c.l.b16 %v618
      %v658 = vunpack.c.l.b16 %v619
      %v659 = vunpack.c.l.b16 %v620
      %v660 = vunpack.c.l.b16 %v621
      %v661 = vunpack.c.l.b16 %v622
      %v662 = vunpack.c.l.b16 %v623
      %v663 = vunpack.c.l.b16 %v624
      %v664 = vunpack.c.l.b16 %v625
      %v665 = vunpack.c.l.b16 %v626
      %v666 = vunpack.c.l.b16 %v627
      %v667 = vunpack.c.l.b16 %v628
      %v668 = vpack.c.b16 %v653, %v652
      %v669 = vpack.c.b16 %v655, %v654
      %v670 = vpack.c.b16 %v657, %v656
      %v671 = vpack.c.b16 %v659, %v658
      %v672 = vpack.c.b16 %v661, %v660
      %v673 = vpack.c.b16 %v663, %v662
      %v674 = vpack.c.b16 %v665, %v664
      %v675 = vpack.c.b16 %v667, %v666
      %684 = vmatprep.subr.bf16.mxu0 0
      %685 = vmatpush1.bf16.msra.mxu0 %v675
      %686 = vmatprep.subr.bf16.mxu0 0
      %687 = vmatpush1.bf16.msra.mxu0 %v674
      %688 = vmatprep.subr.bf16.mxu0 0
      %689 = vmatpush1.bf16.msra.mxu0 %v673
      %690 = vmatprep.subr.bf16.mxu0 0
      %691 = vmatpush1.bf16.msra.mxu0 %v672
      %692 = vmatprep.subr.bf16.mxu0 0
      %693 = vmatpush1.bf16.msra.mxu0 %v671
      %694 = vmatprep.subr.bf16.mxu0 0
      %695 = vmatpush1.bf16.msra.mxu0 %v670
      %696 = vmatprep.subr.bf16.mxu0 0
      %697 = vmatpush1.bf16.msra.mxu0 %v669
      %698 = vmatprep.subr.bf16.mxu0 0
      %699 = vmatpush1.bf16.msra.mxu0 %v668
      %700 = vmatprep.subr.bf16.mxu0 0
      %701 = vmatpush2.bf16.msra.mxu0 0
      %702 = vmatprep.subr.bf16.mxu0 0
      %703 = vmatpush2.bf16.msra.mxu0 0
      %704 = vmatprep.subr.bf16.mxu0 0
      %705 = vmatpush2.bf16.msra.mxu0 0
      %706 = vmatprep.subr.bf16.mxu0 0
      %707 = vmatpush2.bf16.msra.mxu0 0
      %708 = vmatprep.subr.bf16.mxu0 0
      %709 = vmatpush2.bf16.msra.mxu0 0
      %710 = vmatprep.subr.bf16.mxu0 0
      %711 = vmatpush2.bf16.msra.mxu0 0
      %712 = vmatprep.subr.bf16.mxu0 0
      %713 = vmatpush2.bf16.msra.mxu0 0
      %714 = vmatprep.subr.bf16.mxu0 0
      %715 = vmatpush2.bf16.msra.mxu0 0
      %716 = vmatprep.mubr.bf16.mxu0 0
      %717 = vmatmul.mubr.bf16.gmra.mxu0 %v609
      %v718 = vpop.f32.mrf.mxu0
      %v719 = vadd.f32 %v634, %v718
      %v720 = vpop.f32.mrf.mxu0
      %v721 = vpop.f32.mrf.mxu0
      %v722 = vadd.f32 %v634, %v721
      %v723 = vpop.f32.mrf.mxu0
      %724 = vmatprep.mubr.bf16.mxu0 0
      %725 = vmatmul.mubr.bf16.gmra.mxu0 %v610
      %v726 = vpop.f32.mrf.mxu0
      %v727 = vadd.f32 %v634, %v726
      %v728 = vpop.f32.mrf.mxu0
      %v729 = vpop.f32.mrf.mxu0
      %v730 = vadd.f32 %v634, %v729
      %v731 = vpop.f32.mrf.mxu0
      %732 = vmatprep.mubr.bf16.mxu0 0
      %733 = vmatmul.mubr.bf16.gmra.mxu0 %v611
      %v734 = vpop.f32.mrf.mxu0
      %v735 = vadd.f32 %v634, %v734
      %v736 = vpop.f32.mrf.mxu0
      %v737 = vpop.f32.mrf.mxu0
      %v738 = vadd.f32 %v634, %v737
      %v739 = vpop.f32.mrf.mxu0
      %740 = vmatprep.mubr.bf16.mxu0 0
      %741 = vmatmul.mubr.bf16.gmra.mxu0 %v612
      %v742 = vpop.f32.mrf.mxu0
      %v743 = vadd.f32 %v634, %v742
      %v744 = vpop.f32.mrf.mxu0
      %v745 = vpop.f32.mrf.mxu0
      %v746 = vadd.f32 %v634, %v745
      %v747 = vpop.f32.mrf.mxu0
      %748 = vdwg.mxu0
      %v749 = vmul.f32 %v719, 0.01
      %v750 = vmul.f32 %v722, 0.01
      %v751 = vmul.f32 %v727, 0.01
      %v752 = vmul.f32 %v730, 0.01
      %v753 = vmul.f32 %v735, 0.01
      %v754 = vmul.f32 %v738, 0.01
      %v755 = vmul.f32 %v743, 0.01
      %v756 = vmul.f32 %v746, 0.01
      %v757 = vmax.f32 %v719, %v749
      %v758 = vmax.f32 %v722, %v750
      %v759 = vmax.f32 %v727, %v751
      %v760 = vmax.f32 %v730, %v752
      %v761 = vmax.f32 %v735, %v753
      %v762 = vmax.f32 %v738, %v754
      %v763 = vmax.f32 %v743, %v755
      %v764 = vmax.f32 %v746, %v756
      %v765 = vpack.c.bf16 %v758, %v757
      %v766 = vpack.c.bf16 %v760, %v759
      %v767 = vpack.c.bf16 %v762, %v761
      %v768 = vpack.c.bf16 %v764, %v763
      %v769 = vld [vmem:[%s7] sm:$0xf]
      %v770 = vld [vmem:[%s7 + $0x4] sm:$0xf]
      %v771 = vld [vmem:[%s7 + $0x8] sm:$0xf]
      %v772 = vld [vmem:[%s7 + $0xc] sm:$0xf]
      %v773 = vld [vmem:[%s7 + $0x10] sm:$0xf]
      %v774 = vld [vmem:[%s7 + $0x14] sm:$0xf]
      %v775 = vld [vmem:[%s7 + $0x18] sm:$0xf]
      %v776 = vld [vmem:[%s7 + $0x1c] sm:$0xf]
      %v777 = vld [vmem:[%s7 + $0x20] sm:$0xf]
      %v778 = vld [vmem:[%s7 + $0x24] sm:$0xf]
      %v779 = vld [vmem:[%s7 + $0x28] sm:$0xf]
      %v780 = vld [vmem:[%s7 + $0x2c] sm:$0xf]
      %v781 = vld [vmem:[%s7 + $0x30] sm:$0xf]
      %v782 = vld [vmem:[%s7 + $0x34] sm:$0xf]
      %v783 = vld [vmem:[%s7 + $0x38] sm:$0xf]
      %v784 = vld [vmem:[%s7 + $0x3c] sm:$0xf]
      %v785 = vld [vmem:[%s8] sm:$0x1]
      %v787 = vlaneseq
      %v788 = vshrl.u32 %v787, 7
      %v789 = vsub.s32 0, %v788
      %v790 = vrot.slane %v785, %v789
      %v808 = vunpack.c.l.b16 %v769
      %v809 = vunpack.c.l.b16 %v770
      %v810 = vunpack.c.l.b16 %v771
      %v811 = vunpack.c.l.b16 %v772
      %v812 = vunpack.c.l.b16 %v773
      %v813 = vunpack.c.l.b16 %v774
      %v814 = vunpack.c.l.b16 %v775
      %v815 = vunpack.c.l.b16 %v776
      %v816 = vunpack.c.l.b16 %v777
      %v817 = vunpack.c.l.b16 %v778
      %v818 = vunpack.c.l.b16 %v779
      %v819 = vunpack.c.l.b16 %v780
      %v820 = vunpack.c.l.b16 %v781
      %v821 = vunpack.c.l.b16 %v782
      %v822 = vunpack.c.l.b16 %v783
      %v823 = vunpack.c.l.b16 %v784
      %v824 = vpack.c.b16 %v809, %v808
      %v825 = vpack.c.b16 %v811, %v810
      %v826 = vpack.c.b16 %v813, %v812
      %v827 = vpack.c.b16 %v815, %v814
      %v828 = vpack.c.b16 %v817, %v816
      %v829 = vpack.c.b16 %v819, %v818
      %v830 = vpack.c.b16 %v821, %v820
      %v831 = vpack.c.b16 %v823, %v822
      %840 = vmatprep.subr.bf16.mxu0 0
      %841 = vmatpush1.bf16.msra.mxu0 %v831
      %842 = vmatprep.subr.bf16.mxu0 0
      %843 = vmatpush1.bf16.msra.mxu0 %v830
      %844 = vmatprep.subr.bf16.mxu0 0
      %845 = vmatpush1.bf16.msra.mxu0 %v829
      %846 = vmatprep.subr.bf16.mxu0 0
      %847 = vmatpush1.bf16.msra.mxu0 %v828
      %848 = vmatprep.subr.bf16.mxu0 0
      %849 = vmatpush1.bf16.msra.mxu0 %v827
      %850 = vmatprep.subr.bf16.mxu0 0
      %851 = vmatpush1.bf16.msra.mxu0 %v826
      %852 = vmatprep.subr.bf16.mxu0 0
      %853 = vmatpush1.bf16.msra.mxu0 %v825
      %854 = vmatprep.subr.bf16.mxu0 0
      %855 = vmatpush1.bf16.msra.mxu0 %v824
      %856 = vmatprep.subr.bf16.mxu0 0
      %857 = vmatpush2.bf16.msra.mxu0 0
      %858 = vmatprep.subr.bf16.mxu0 0
      %859 = vmatpush2.bf16.msra.mxu0 0
      %860 = vmatprep.subr.bf16.mxu0 0
      %861 = vmatpush2.bf16.msra.mxu0 0
      %862 = vmatprep.subr.bf16.mxu0 0
      %863 = vmatpush2.bf16.msra.mxu0 0
      %864 = vmatprep.subr.bf16.mxu0 0
      %865 = vmatpush2.bf16.msra.mxu0 0
      %866 = vmatprep.subr.bf16.mxu0 0
      %867 = vmatpush2.bf16.msra.mxu0 0
      %868 = vmatprep.subr.bf16.mxu0 0
      %869 = vmatpush2.bf16.msra.mxu0 0
      %870 = vmatprep.subr.bf16.mxu0 0
      %871 = vmatpush2.bf16.msra.mxu0 0
      %872 = vmatprep.mubr.bf16.mxu0 0
      %873 = vmatmul.mubr.bf16.gmra.mxu0 %v765
      %v874 = vpop.f32.mrf.mxu0
      %v875 = vadd.f32 %v790, %v874
      %v876 = vpop.f32.mrf.mxu0
      %v877 = vpop.f32.mrf.mxu0
      %v878 = vadd.f32 %v790, %v877
      %v879 = vpop.f32.mrf.mxu0
      %880 = vmatprep.mubr.bf16.mxu0 0
      %881 = vmatmul.mubr.bf16.gmra.mxu0 %v766
      %v882 = vpop.f32.mrf.mxu0
      %v883 = vadd.f32 %v790, %v882
      %v884 = vpop.f32.mrf.mxu0
      %v885 = vpop.f32.mrf.mxu0
      %v886 = vadd.f32 %v790, %v885
      %v887 = vpop.f32.mrf.mxu0
      %888 = vmatprep.mubr.bf16.mxu0 0
      %889 = vmatmul.mubr.bf16.gmra.mxu0 %v767
      %v890 = vpop.f32.mrf.mxu0
      %v891 = vadd.f32 %v790, %v890
      %v892 = vpop.f32.mrf.mxu0
      %v893 = vpop.f32.mrf.mxu0
      %v894 = vadd.f32 %v790, %v893
      %v895 = vpop.f32.mrf.mxu0
      %896 = vmatprep.mubr.bf16.mxu0 0
      %897 = vmatmul.mubr.bf16.gmra.mxu0 %v768
      %v898 = vpop.f32.mrf.mxu0
      %v899 = vadd.f32 %v790, %v898
      %v900 = vpop.f32.mrf.mxu0
      %v901 = vpop.f32.mrf.mxu0
      %v902 = vadd.f32 %v790, %v901
      %v903 = vpop.f32.mrf.mxu0
      %904 = vdwg.mxu0
      %v905 = vtanh.pop %v875
      %v906 = vtanh.pop %v878
      %v907 = vtanh.pop %v883
      %v908 = vtanh.pop %v886
      %v909 = vtanh.pop %v891
      %v910 = vtanh.pop %v894
      %v911 = vtanh.pop %v899
      %v912 = vtanh.pop %v902
      %vm913 = vcmask 15360
      %914 = vst.msk [vmem:[%s368] sm:$0xff] %vm913, %v905
      %915 = vst.msk [vmem:[%s368 + $0x8] sm:$0xff] %vm913, %v906
      %916 = vst.msk [vmem:[%s368 + $0x10] sm:$0xff] %vm913, %v907
      %917 = vst.msk [vmem:[%s368 + $0x18] sm:$0xff] %vm913, %v908
      %918 = vst.msk [vmem:[%s368 + $0x20] sm:$0xff] %vm913, %v909
      %919 = vst.msk [vmem:[%s368 + $0x28] sm:$0xff] %vm913, %v910
      %920 = vst.msk [vmem:[%s368 + $0x30] sm:$0xff] %vm913, %v911
      %921 = vst.msk [vmem:[%s368 + $0x38] sm:$0xff] %vm913, %v912
      %s922 = smul.u32 %s24, 2
      %s923 = sadd.s32 %s922, %s25
      %s924 = smul.u32 8, %s923
      %p925 = scmp.lt.s32.totalorder %s924, 15
      %s926 = scalar_select %p925, %s924, 15
      %s927 = smul.addr %s926, 8
      %s928 = scalar_lea.vmem %s9, %s927
      // Predicated region
      $region57: #{tpu_custom_call.1} parent=55 // pred_check
        %p929 = pneg %p253
      $region58: #{tpu_custom_call.1} parent=55 // pred_check_branch
        %931 = sbr.rel (%p929) target = $region60
      $region59: #{tpu_custom_call.1} parent=55 // pred_region
        %s932 = smul.u32 %s24, 2
        %s933 = sadd.s32 %s932, %s25
        %s934 = smul.u32 8, %s933
      $region60: #{tpu_custom_call.1} parent=55 // pred_fallthru
        _
    $region56: #{tpu_custom_call.1} parent=5 // pred_fallthru
      _
    %p935 = scmp.le.s32.totalorder 2, %s15
    // Predicated region
    $region61: #{tpu_custom_call.1} parent=5 // pred_check
      %p936 = pneg %p935
    $region62: #{tpu_custom_call.1} parent=5 // pred_check_branch
      %938 = sbr.rel (%p936) target = $region64
    $region63: #{tpu_custom_call.1} parent=5 // pred_region
      %s939 = ssub.s32 %s15, 2
      // Predicated region
      $region65: #{tpu_custom_call.1} parent=63 // pred_check
        %p940 = pneg %p259
      $region66: #{tpu_custom_call.1} parent=63 // pred_check_branch
        %942 = sbr.rel (%p940) target = $region68
      $region67: #{tpu_custom_call.1} parent=63 // pred_region
        %s943 = smul.u32 %s26, 2
        %s944 = sadd.s32 %s943, %s27
        %s945 = smul.u32 8, %s944
        %p946 = scmp.lt.s32.totalorder %s945, 15
        %s947 = scalar_select %p946, %s945, 15
        %s948 = smul.addr %s947, 8
        %s949 = scalar_lea.vmem %s9, %s948
      $region68: #{tpu_custom_call.1} parent=63 // pred_fallthru
        _
    $region64: #{tpu_custom_call.1} parent=5 // pred_fallthru
      _
  $region6: #{tpu_custom_call.1} parent=0 // loop_footer
    %s19 = sadd.s32 1, %s15
  $region7: #{tpu_custom_call.1} parent=0 // loop_footer_branch
    %14 = sbr.rel target = $region3
  $region8: #{tpu_custom_call.1} parent=0 // loop_exit
    _

</llo_original>
